<compile_context>
chip_gen: v7x
topology: tpu7x:2x2x1
jax: 0.10.0
libtpu: 0.0.40
codegen_flags: <defaults>
</compile_context>

<pallas_src>
import functools
import math

import jax
import jax.numpy as jnp
from jax.experimental import pallas as pl
from jax.experimental.pallas import tpu as pltpu


def _round_up(a, b):
    return (a + b - 1) // b * b


def _label_smoothing_kernel(x_ref, tgt_ref, loss_ref, *td_refs,
                            confidence, smooth_val, log_conf, log_smooth,
                            padding_idx, vocab, vp, tv):
    j = pl.program_id(1)

    x = x_ref[...].astype(jnp.float32)   # (tn, tv) log-probs
    tgt = tgt_ref[...]                   # (tn, 1)  int32

    # Global column index for this column tile. (1, tv) iota broadcasts against the
    # (tn, 1) targets -> no full (tn, tv) int32 iota materialized.
    cols = jax.lax.broadcasted_iota(jnp.int32, (1, tv), 1) + j * tv
    is_tgt = cols == tgt                 # (tn, tv) via broadcast
    row_keep = tgt != padding_idx        # (tn, 1)

    # Label-smoothed target distribution and its log, both trace-time constants
    # selected per element (log() never evaluated at runtime).  With a zero
    # coefficient the matching log constant is 0, so 0*log(0) folds to 0 exactly
    # like the ATen kl_div convention.
    td = jnp.where(is_tgt, jnp.float32(confidence), jnp.float32(smooth_val))
    log_td = jnp.where(is_tgt, jnp.float32(log_conf), jnp.float32(log_smooth))

    contrib = td * (log_td - x)          # KLDiv pointwise term
    if vp != vocab:                      # zero the lane-padding columns (static branch)
        contrib = jnp.where(cols < vocab, contrib, 0.0)
    contrib = jnp.where(row_keep, contrib, 0.0)

    # Per-(row-block, col-block) partial sum; lane-dense (1, 1, tv) store.
    loss_ref[...] = jnp.sum(contrib, axis=0, keepdims=True)[None]

    # ---- optional true_dist side output (self.true_dist in the module) ----
    if td_refs:
        td_out = jnp.where(row_keep, td, 0.0)
        if vp != vocab:
            td_out = jnp.where(cols < vocab, td_out, 0.0)
        td_refs[0][...] = td_out


def label_smoothing_loss(x, target, *, size, padding_idx, smoothing=0.0,
                         return_true_dist=True,
                         max_rows_per_block=512, max_cols_per_block=2048,
                         x_tile_bytes=4 << 20):
    """Returns (loss, true_dist) (or just loss) matching LabelSmoothing.forward."""
    N, V = x.shape
    assert V == size
    if x.dtype not in (jnp.float32, jnp.bfloat16):
        x = x.astype(jnp.float32)
    target = target.astype(jnp.int32)

    # ---- tile sizing (lane-dense vocab, VMEM-budgeted row tile) ----
    vp = _round_up(V, 128)
    tv = min(vp, _round_up(int(max_cols_per_block), 128))
    tn = max(8, (int(x_tile_bytes) // (tv * 4)) // 8 * 8)
    tn = min(tn, int(max_rows_per_block), _round_up(N, 8))
    np_rows = _round_up(N, tn)
    ni, nj = np_rows // tn, vp // tv

    # ---- pad rows (target -> padding_idx so they contribute 0) and vocab lanes ----
    x_p = x
    if (np_rows, vp) != (N, V):
        x_p = jnp.pad(x, ((0, np_rows - N), (0, vp - V)))
    tgt_p = target
    if np_rows != N:
        tgt_p = jnp.pad(target, (0, np_rows - N), constant_values=int(padding_idx))
    tgt2d = tgt_p.reshape(np_rows, 1)

    confidence = 1.0 - float(smoothing)
    smooth_val = float(smoothing) / (size - 2)

    kernel = functools.partial(
        _label_smoothing_kernel,
        confidence=confidence,
        smooth_val=smooth_val,
        log_conf=math.log(confidence) if confidence > 0.0 else 0.0,
        log_smooth=math.log(smooth_val) if smooth_val > 0.0 else 0.0,
        padding_idx=int(padding_idx),
        vocab=int(V), vp=int(vp), tv=int(tv),
    )

    out_shape = [jax.ShapeDtypeStruct((ni, 1, vp), jnp.float32)]       # loss partials
    out_specs = [pl.BlockSpec((1, 1, tv), lambda i, j: (i, 0, j))]
    if return_true_dist:
        out_shape.append(jax.ShapeDtypeStruct((np_rows, vp), jnp.float32))
        out_specs.append(pl.BlockSpec((tn, tv), lambda i, j: (i, j)))

    # Resident VMEM estimate: double-buffered x tile (+ true_dist tile) + slack.
    tile_bytes = tn * tv * x_p.dtype.itemsize
    td_bytes = tn * tv * 4 if return_true_dist else 0
    vmem_est = 2 * (tile_bytes + td_bytes) + (2 << 20)
    vmem_limit = min(max(2 * vmem_est, 32 << 20), 64 << 20)   # safe incl. v7x (64 MiB)

    outs = pl.pallas_call(
        kernel,
        out_shape=tuple(out_shape),
        grid_spec=pltpu.PrefetchScalarGridSpec(
            num_scalar_prefetch=0,
            grid=(ni, nj),
            in_specs=[
                pl.BlockSpec((tn, tv), lambda i, j: (i, j)),
                pl.BlockSpec((tn, 1), lambda i, j: (i, 0)),
            ],
            out_specs=out_specs,
        ),
        compiler_params=pltpu.CompilerParams(
            dimension_semantics=("parallel", "parallel"),
            vmem_limit_bytes=int(vmem_limit),
        ),
    )(x_p, tgt2d)

    loss = jnp.sum(outs[0])
    if return_true_dist:
        true_dist = outs[1][:N, :V]
        return loss, true_dist
    return loss


def _reference(x, target, size, padding_idx, smoothing):
    confidence = 1.0 - smoothing
    smooth_val = smoothing / (size - 2)
    N, V = x.shape
    td = jnp.full((N, V), smooth_val, jnp.float32)
    td = td.at[jnp.arange(N), target].set(confidence)
    td = jnp.where((target == padding_idx)[:, None], 0.0, td)
    contrib = jnp.where(td > 0, td * (jnp.log(td) - x), 0.0)
    return jnp.sum(contrib), td


if __name__ == "__main__":
    size = 32          # vocab size (x.size(1))
    padding_idx = 0
    smoothing = 0.1
    N = 16             # number of token rows

    key = jax.random.PRNGKey(0)
    kx, kt = jax.random.split(key)
    # x must be log-probabilities (input to KLDivLoss)
    logits = jax.random.normal(kx, (N, size), jnp.float32)
    x = jax.nn.log_softmax(logits, axis=-1)
    target = jax.random.randint(kt, (N,), 0, size, jnp.int32)
    # make sure at least one row hits the padding_idx path
    target = target.at[3].set(padding_idx)

    loss, true_dist = label_smoothing_loss(
        x, target, size=size, padding_idx=padding_idx, smoothing=smoothing)
    loss = jax.block_until_ready(loss)
    true_dist = jax.block_until_ready(true_dist)

    # loss-only fast path (no true_dist HBM writeback)
    loss_only = jax.block_until_ready(
        label_smoothing_loss(x, target, size=size, padding_idx=padding_idx,
                             smoothing=smoothing, return_true_dist=False))

    ref_loss, ref_td = _reference(x, target, size, padding_idx, smoothing)
    assert jnp.allclose(loss, ref_loss, rtol=1e-5, atol=1e-5), (loss, ref_loss)
    assert jnp.allclose(loss_only, ref_loss, rtol=1e-5, atol=1e-5), (loss_only, ref_loss)
    assert jnp.allclose(true_dist, ref_td, rtol=1e-6, atol=1e-6)

    print("KERNEL_OK")
</pallas_src>

<mosaic_0001>
module attributes {stable_mosaic.version = 11 : i64} {
  func.func @_label_smoothing_kernel(%arg0: i32, %arg1: i32, %arg2: memref<16x128xf32, #tpu.memory_space<vmem>>, %arg3: memref<16x1xi32, #tpu.memory_space<vmem>>, %arg4: memref<1x1x128xf32, #tpu.memory_space<vmem>>, %arg5: memref<16x128xf32, #tpu.memory_space<vmem>>) attributes {dimension_semantics = [#tpu.dimension_semantics<parallel>, #tpu.dimension_semantics<parallel>], iteration_bounds = array<i64: 1, 1>, scalar_prefetch = 0 : i64, scratch_operands = 0 : i64, tpu.core_type = #tpu.core_type<tc>, window_params = [{transform_indices = @transform_0, window_bounds = array<i64: 16, 128>}, {transform_indices = @transform_1, window_bounds = array<i64: 16, 1>}, {transform_indices = @transform_2, window_bounds = array<i64: 1, 1, 128>}, {transform_indices = @transform_3, window_bounds = array<i64: 16, 128>}]} {
    %c0 = arith.constant 0 : index
    %c0_0 = arith.constant 0 : index
    %0 = vector.load %arg2[%c0, %c0_0] : memref<16x128xf32, #tpu.memory_space<vmem>>, vector<16x128xf32>
    %c0_1 = arith.constant 0 : index
    %c0_2 = arith.constant 0 : index
    %1 = vector.load %arg3[%c0_1, %c0_2] : memref<16x1xi32, #tpu.memory_space<vmem>>, vector<16x1xi32>
    %2 = tpu.iota {dimensions = array<i32: 1>} : vector<1x128xi32>
    %c128_i32 = arith.constant 128 : i32
    %3 = arith.muli %arg1, %c128_i32 : i32
    %4 = vector.broadcast %3 : i32 to vector<1x128xi32>
    %5 = arith.addi %2, %4 : vector<1x128xi32>
    %6 = vector.broadcast %5 : vector<1x128xi32> to vector<16x128xi32>
    %7 = vector.broadcast %1 : vector<16x1xi32> to vector<16x128xi32>
    %8 = arith.cmpi eq, %6, %7 : vector<16x128xi32>
    %c0_i32 = arith.constant 0 : i32
    %9 = vector.broadcast %c0_i32 : i32 to vector<16x1xi32>
    %10 = arith.cmpi ne, %1, %9 : vector<16x1xi32>
    %cst = arith.constant 0.899999976 : f32
    %cst_3 = arith.constant 0.00333333341 : f32
    %11 = vector.broadcast %cst : f32 to vector<16x128xf32>
    %12 = vector.broadcast %cst_3 : f32 to vector<16x128xf32>
    %13 = arith.select %8, %11, %12 : vector<16x128xi1>, vector<16x128xf32>
    %cst_4 = arith.constant -0.105360515 : f32
    %cst_5 = arith.constant -5.70378256 : f32
    %14 = vector.broadcast %cst_4 : f32 to vector<16x128xf32>
    %15 = vector.broadcast %cst_5 : f32 to vector<16x128xf32>
    %16 = arith.select %8, %14, %15 : vector<16x128xi1>, vector<16x128xf32>
    %17 = arith.subf %16, %0 : vector<16x128xf32>
    %18 = arith.mulf %13, %17 : vector<16x128xf32>
    %c32_i32 = arith.constant 32 : i32
    %19 = vector.broadcast %c32_i32 : i32 to vector<1x128xi32>
    %20 = arith.cmpi slt, %5, %19 : vector<1x128xi32>
    %cst_6 = arith.constant 0.000000e+00 : f32
    %21 = vector.shape_cast %20 : vector<1x128xi1> to vector<1x128xi1>
    %22 = vector.broadcast %21 : vector<1x128xi1> to vector<16x128xi1>
    %23 = vector.broadcast %cst_6 : f32 to vector<16x128xf32>
    %24 = arith.select %22, %18, %23 : vector<16x128xi1>, vector<16x128xf32>
    %cst_7 = arith.constant 0.000000e+00 : f32
    %25 = vector.shape_cast %10 : vector<16x1xi1> to vector<16x1xi1>
    %26 = vector.broadcast %25 : vector<16x1xi1> to vector<16x128xi1>
    %27 = vector.broadcast %cst_7 : f32 to vector<16x128xf32>
    %28 = arith.select %26, %24, %27 : vector<16x128xi1>, vector<16x128xf32>
    %cst_8 = arith.constant dense<0.000000e+00> : vector<128xf32>
    %29 = vector.multi_reduction <add>, %28, %cst_8 [0] : vector<16x128xf32> to vector<128xf32>
    %30 = vector.shape_cast %29 : vector<128xf32> to vector<1x128xf32>
    %31 = vector.shape_cast %30 : vector<1x128xf32> to vector<1x1x128xf32>
    %c0_9 = arith.constant 0 : index
    %c0_10 = arith.constant 0 : index
    %c0_11 = arith.constant 0 : index
    %32 = vector.load %arg4[%c0_9, %c0_10, %c0_11] : memref<1x1x128xf32, #tpu.memory_space<vmem>>, vector<1x1x128xf32>
    tpu.vector_store %arg4[%c0_9, %c0_10, %c0_11], %31 {strides = array<i32>} : memref<1x1x128xf32, #tpu.memory_space<vmem>>, vector<1x1x128xf32>,
    %cst_12 = arith.constant 0.000000e+00 : f32
    %33 = vector.shape_cast %10 : vector<16x1xi1> to vector<16x1xi1>
    %34 = vector.broadcast %33 : vector<16x1xi1> to vector<16x128xi1>
    %35 = vector.broadcast %cst_12 : f32 to vector<16x128xf32>
    %36 = arith.select %34, %13, %35 : vector<16x128xi1>, vector<16x128xf32>
    %c32_i32_13 = arith.constant 32 : i32
    %37 = vector.broadcast %c32_i32_13 : i32 to vector<1x128xi32>
    %38 = arith.cmpi slt, %5, %37 : vector<1x128xi32>
    %cst_14 = arith.constant 0.000000e+00 : f32
    %39 = vector.shape_cast %38 : vector<1x128xi1> to vector<1x128xi1>
    %40 = vector.broadcast %39 : vector<1x128xi1> to vector<16x128xi1>
    %41 = vector.broadcast %cst_14 : f32 to vector<16x128xf32>
    %42 = arith.select %40, %36, %41 : vector<16x128xi1>, vector<16x128xf32>
    %c0_15 = arith.constant 0 : index
    %c0_16 = arith.constant 0 : index
    %43 = vector.load %arg5[%c0_15, %c0_16] : memref<16x128xf32, #tpu.memory_space<vmem>>, vector<16x128xf32>
    tpu.vector_store %arg5[%c0_15, %c0_16], %42 {strides = array<i32>} : memref<16x128xf32, #tpu.memory_space<vmem>>, vector<16x128xf32>,
    return
  }
  func.func @transform_0(%arg0: i32, %arg1: i32) -> (i32, i32) {
    %c0_i32 = arith.constant 0 : i32
    return %arg0, %arg1 : i32, i32
  }
  func.func @transform_1(%arg0: i32, %arg1: i32) -> (i32, i32) {
    %c0_i32 = arith.constant 0 : i32
    %c0_i32_0 = arith.constant 0 : i32
    return %arg0, %c0_i32 : i32, i32
  }
  func.func @transform_2(%arg0: i32, %arg1: i32) -> (i32, i32, i32) {
    %c0_i32 = arith.constant 0 : i32
    %c0_i32_0 = arith.constant 0 : i32
    return %arg0, %c0_i32, %arg1 : i32, i32, i32
  }
  func.func @transform_3(%arg0: i32, %arg1: i32) -> (i32, i32) {
    %c0_i32 = arith.constant 0 : i32
    return %arg0, %arg1 : i32, i32
  }
}

</mosaic_0001>

<llo_original>
// kernel: tpu_custom_call.1
$region0: #{tpu_custom_call.1}
  #allocation0 [shape = 'u32[]', space=smem, size = 0x4, offset = 0x4, fixed_abs, tag = 'smem constant byte address 0x4 - core index']
  #allocation1 [shape = 'u32[144,128]{1,0:T(1,128)}', space=vmem, size = 0x12000, scoped, tag = 'internal scratch']
  %s0 = inlined_call_operand.vmem [shape: f32[16,128], index: 0, kind: input, shape index: {}]
  %s1 = inlined_call_operand.vmem [shape: s32[16,1], index: 1, kind: input, shape index: {}]
  %s2 = inlined_call_operand.hbm [shape: f32[1,1,128], index: 2, kind: output, shape index: {0}]
  %s3 = inlined_call_operand.hbm [shape: f32[16,128], index: 3, kind: output, shape index: {1}]
  %4 = xla_tuple %s2, %s3
  %s5 = sld [smem:[#allocation0]]
  $region26: #{tpu_custom_call.1} parent=0
    _
  %s7 = ssub.s32 1, %s5
  %s8 = scalar_select 0, %s7, %s5
  $region1: #{tpu_custom_call.1} parent=0
    #allocation2 [shape = 'u8[512]{0}', space=vmem, size = 0x400, scoped, tag = 'output window, operand 0, single buffered']
    #allocation3 [shape = 's32[1]{0}', space=sflag, size = 0x4, scoped, tag = 'scoped memory for tpu_custom_call.1']
    #allocation4 [shape = 'u8[8192]{0}', space=vmem, size = 0x2000, scoped, tag = 'output window, operand 1, single buffered']
    #allocation5 [shape = 's32[1]{0}', space=sflag, size = 0x4, scoped, tag = 'scoped memory for tpu_custom_call.1']
    %9 = vsyncpa [#allocation3], 0
    %10 = vsyncpa [#allocation5], 0
    // Predicated region
    $region2: #{tpu_custom_call.1} parent=1 // pred_check
      _
    $region3: #{tpu_custom_call.1} parent=1 // pred_check_branch
      %12 = sbr.rel (0) target = $region5
    $region4: #{tpu_custom_call.1} parent=1 // pred_region
      _
    $region5: #{tpu_custom_call.1} parent=1 // pred_fallthru
      _
    // Predicated region
    $region6: #{tpu_custom_call.1} parent=1 // pred_check
      _
    $region7: #{tpu_custom_call.1} parent=1 // pred_check_branch
      %14 = sbr.rel (0) target = $region9
    $region8: #{tpu_custom_call.1} parent=1 // pred_region
      _
    $region9: #{tpu_custom_call.1} parent=1 // pred_fallthru
      _
    %v15 = vld [vmem:[%s0] sm:$0xff]
    %v16 = vld [vmem:[%s0 + $0x8] sm:$0xff]
    %v17 = vld [vmem:[%s1] sm:$0xff]
    %v18 = vld [vmem:[%s1 + $0x8] sm:$0xff]
    %v19 = vlaneseq
    %v20 = vand.u32 %v19, 127
    %s21 = smul.u32 0, 128
    %v22 = vstv %s21
    %v23 = vadd.s32 %v20, %v22
    %24 = vset.pattern.permute.xlu0 0
    %25 = vperm.xlu0 %24, %v17
    %v26 = vpop.permute.xlu0 %25
    %27 = vset.pattern.permute.xlu0 0
    %28 = vperm.xlu0 %27, %v18
    %v29 = vpop.permute.xlu0 %28
    %vm30 = vcmp.eq.s32.totalorder %v23, %v26
    %vm31 = vcmp.eq.s32.totalorder %v23, %v29
    %vm32 = vcmp.ne.s32.totalorder %v17, 0
    %vm33 = vcmp.ne.s32.totalorder %v18, 0
    %v34 = vsel %vm30, 0.9, 0.0033333334
    %v35 = vsel %vm31, 0.9, 0.0033333334
    %v36 = vsel %vm30, -0.105360515, -5.7037826
    %v37 = vsel %vm31, -0.105360515, -5.7037826
    %v38 = vsub.f32 %v36, %v15
    %v39 = vsub.f32 %v37, %v16
    %v40 = vmul.f32 %v34, %v38
    %v41 = vmul.f32 %v35, %v39
    %vm42 = vcmp.lt.s32.totalorder %v23, 32
    %v43 = vsel %vm42, 1, 0
    %vm44 = vcmp.eq.s32.totalorder %v43, 1
    %v45 = vsel %vm44, %v40, 0.0
    %v46 = vsel %vm44, %v41, 0.0
    %v47 = vsel %vm32, 1, 0
    %v48 = vsel %vm33, 1, 0
    %49 = vset.pattern.permute.xlu0 0
    %50 = vperm.xlu0 %49, %v47
    %v51 = vpop.permute.xlu0 %50
    %52 = vset.pattern.permute.xlu0 0
    %53 = vperm.xlu0 %52, %v48
    %v54 = vpop.permute.xlu0 %53
    %vm55 = vcmp.eq.s32.totalorder %v51, 1
    %vm56 = vcmp.eq.s32.totalorder %v54, 1
    %v57 = vsel %vm55, %v45, 0.0
    %v58 = vsel %vm56, %v46, 0.0
    %v59 = vadd.f32 %v57, %v58
    %v60 = vrot.slane %v59, 4
    %v61 = vadd.f32 %v59, %v60
    %v62 = vrot.slane %v61, 2
    %v63 = vadd.f32 %v61, %v62
    %v64 = vrot.slane %v63, 1
    %v65 = vadd.f32 %v63, %v64
    %66 = vst [vmem:[#allocation2] sm:$0x1] %v65
    %v67 = vsel %vm55, %v34, 0.0
    %v68 = vsel %vm56, %v35, 0.0
    %v69 = vsel %vm44, %v67, 0.0
    %v70 = vsel %vm44, %v68, 0.0
    %71 = vst [vmem:[#allocation4] sm:$0xff] %v69
    %72 = vst [vmem:[#allocation4 + $0x8] sm:$0xff] %v70
    // Predicated region
    $region10: #{tpu_custom_call.1} parent=1 // pred_check
      _
    $region11: #{tpu_custom_call.1} parent=1 // pred_check_branch
      %74 = sbr.rel (0) target = $region13
    $region12: #{tpu_custom_call.1} parent=1 // pred_region
      %s76 = ssub.s32 16, 16
      %77 = vsyncadd [#allocation3], %s76
      %s79 = sshll.u32 [#allocation2], 4
      %s80 = int_to_ptr.vmem [resolvable:$true] %s79
      %82 = dma.vmem_to_hbm [thread:$0]  %s80, 16, %s2, [#allocation3]
    $region13: #{tpu_custom_call.1} parent=1 // pred_fallthru
      _
    // Predicated region
    $region14: #{tpu_custom_call.1} parent=1 // pred_check
      _
    $region15: #{tpu_custom_call.1} parent=1 // pred_check_branch
      %84 = sbr.rel (0) target = $region17
    $region16: #{tpu_custom_call.1} parent=1 // pred_region
      %s86 = ssub.s32 256, 256
      %87 = vsyncadd [#allocation5], %s86
      %s88 = sshll.u32 [#allocation4], 4
      %s89 = int_to_ptr.vmem [resolvable:$true] %s88
      %94 = dma.vmem_to_hbm [thread:$0]  %s89, 256, %s3, [#allocation5], 128, 128, 8
    $region17: #{tpu_custom_call.1} parent=1 // pred_fallthru
      _
    // Predicated region
    $region18: #{tpu_custom_call.1} parent=1 // pred_check
      _
    $region19: #{tpu_custom_call.1} parent=1 // pred_check_branch
      %96 = sbr.rel (0) target = $region21
    $region20: #{tpu_custom_call.1} parent=1 // pred_region
      %97 = dma.done [#allocation3], 16
    $region21: #{tpu_custom_call.1} parent=1 // pred_fallthru
      _
    // Predicated region
    $region22: #{tpu_custom_call.1} parent=1 // pred_check
      _
    $region23: #{tpu_custom_call.1} parent=1 // pred_check_branch
      %99 = sbr.rel (0) target = $region25
    $region24: #{tpu_custom_call.1} parent=1 // pred_region
      %100 = dma.done [#allocation5], 256
    $region25: #{tpu_custom_call.1} parent=1 // pred_fallthru
      _
    %101 = vsyncpa [#allocation3], 1
    %102 = vsyncpa [#allocation5], 1

</llo_original>
